<compile_context>
chip_gen: v7x
topology: tpu7x:2x2x1
jax: 0.10.0
libtpu: 0.0.40
codegen_flags: <defaults>
</compile_context>

<pallas_src>
import functools
import math

import jax
import jax.numpy as jnp
from jax import lax
from jax.experimental import pallas as pl
from jax.experimental.pallas import tpu as pltpu

EPS = 1e-5  # torch.nn.LayerNorm default eps


def _layernorm_kernel(x_ref, g_ref, o_ref, *, dim):
    # x_ref: (tile_rows, dim); g_ref: (1, dim) holding (gamma + 1.0) in f32.
    # One pass over the tile for statistics, one fused pass for the store.
    x = x_ref[...].astype(jnp.float32)
    inv_dim = 1.0 / float(dim)  # constant multiply, no divide
    mean = jnp.sum(x, axis=-1, keepdims=True) * inv_dim
    mean_sq = jnp.sum(x * x, axis=-1, keepdims=True) * inv_dim
    # Biased variance via E[x^2] - mean^2 in f32; clamp guards the tiny negative
    # values cancellation can produce.  (Slightly less stable than the two-pass
    # centered form for inputs with |mean| >> std.)
    var = jnp.maximum(mean_sq - mean * mean, 0.0)
    o_ref[...] = ((x - mean) * lax.rsqrt(var + EPS) * g_ref[...]).astype(o_ref.dtype)


def _layernorm_packed_kernel(x_ref, g_ref, m_ref, o_ref, *, dim):
    # Lane-dense small-dim path: each 128-lane row packs 128//dim logical rows.
    # m_ref is a (128, 128) 0/1 block-diagonal mask; x @ m broadcasts every
    # segment's sum to all lanes of that segment (MXU is otherwise idle here).
    x = x_ref[...].astype(jnp.float32)
    inv_dim = 1.0 / float(dim)
    hp = lax.Precision.HIGHEST  # keep the matmul reduction at ~f32 accuracy
    m = m_ref[...]
    seg_sum = jnp.dot(x, m, preferred_element_type=jnp.float32, precision=hp)
    seg_sumsq = jnp.dot(x * x, m, preferred_element_type=jnp.float32, precision=hp)
    mean = seg_sum * inv_dim
    var = jnp.maximum(seg_sumsq * inv_dim - mean * mean, 0.0)
    o_ref[...] = ((x - mean) * lax.rsqrt(var + EPS) * g_ref[...]).astype(o_ref.dtype)


def _round_down(x, m):
    return (x // m) * m


def _sublane(dtype):
    # Rows per packed vreg stripe: 8 for f32, 16 for bf16, 32 for int8.
    return max(8, 32 // max(1, jnp.dtype(dtype).itemsize))


def _vmem_budget_and_limit():
    """Per-generation VMEM budgeting."""
    try:
        cap = int(pltpu.get_tpu_info().vmem_capacity_bytes)
    except Exception:
        cap = 64 * 1024 * 1024  # conservative fallback (safe everywhere)
    if cap >= 128 * 1024 * 1024:
        # v5e / v6e: 128 MiB physical; default scoped limit (~32 MiB) is far
        # below it, so raise both budget and limit.
        budget = 48 * 1024 * 1024
        limit = 80 * 1024 * 1024
    else:
        # v7x: 64 MiB per TensorCore -- stay conservative (do not port the
        # 128 MiB-part numbers here).
        budget = cap // 4
        limit = cap // 2
    return budget, limit


def _pick_tile_rows(rows, dim, x_dtype, out_dtype, budget_bytes,
                    target_block_bytes=8 * 1024 * 1024, min_grid_steps=8):
    in_b = jnp.dtype(x_dtype).itemsize
    out_b = jnp.dtype(out_dtype).itemsize
    sub = _sublane(x_dtype)
    if rows <= sub:
        return rows  # single full-extent block (tiny inputs only)
    # Per-row VMEM footprint: double-buffered in/out blocks plus the f32 upcast
    # copy and broadcasted stats live inside the body.
    vmem_bytes_per_row = 2 * (in_b + out_b) * dim + 2 * 4 * dim
    fit_rows = max(sub, budget_bytes // vmem_bytes_per_row)
    # Amortize the ~0.35us/step overhead: size blocks by HBM bytes per step.
    byte_rows = max(sub, target_block_bytes // max(1, in_b * dim))
    # Keep >= min_grid_steps grid steps (and always >= 2 when rows allow) so
    # both v7x TensorCores get work and the pipeline overlaps DMA with compute.
    step_rows = max(sub, _round_down(-(-rows // min_grid_steps), sub))
    tile = min(fit_rows, byte_rows, step_rows)
    tile = max(sub, _round_down(tile, sub))
    return min(tile, rows)


def layernorm(x, gamma, *, tile_rows=None):
    """x: (..., dim); gamma: (dim,). Returns LayerNorm(x) * (gamma + 1.0)."""
    orig_shape = x.shape
    dim = int(orig_shape[-1])
    rows = int(math.prod(orig_shape[:-1]))
    x2 = x.reshape(rows, dim)

    # Hoist (gamma + 1.0) out of the kernel; keep it in f32.
    # TODO(synk): the torch module's gamma.ndim == 2 rearrange branch is dead
    # for its own (dim,) Parameter; only 1-D gamma is supported here.
    g2 = (gamma.astype(jnp.float32) + 1.0).reshape(1, dim)

    # Lane-dense packing for small feature dims that divide the 128-lane width.
    pack = 128 // dim if (dim < 128 and 128 % dim == 0) else 1
    use_packed = pack > 1 and rows >= pack and rows % pack == 0
    if use_packed:
        rows_k, dim_k = rows // pack, 128
        x_k = x2.reshape(rows_k, 128)
        g_k = jnp.tile(g2, (1, pack))  # (1, 128): lane j -> gamma[j % dim] + 1
        seg = jnp.arange(128, dtype=jnp.int32) // dim
        mask = (seg[:, None] == seg[None, :]).astype(jnp.float32)  # (128, 128)
        extra_inputs = (mask,)
        extra_specs = [pl.BlockSpec((128, 128), lambda i: (0, 0))]
        kernel = functools.partial(_layernorm_packed_kernel, dim=dim)
    else:
        rows_k, dim_k = rows, dim
        x_k, g_k = x2, g2
        extra_inputs = ()
        extra_specs = []
        kernel = functools.partial(_layernorm_kernel, dim=dim)

    budget, vmem_limit = _vmem_budget_and_limit()
    if tile_rows is None:
        tile_rows = _pick_tile_rows(rows_k, dim_k, x.dtype, x.dtype, budget)
    else:
        tile_rows = int(tile_rows)
        sub = _sublane(x.dtype)
        if tile_rows >= rows_k:
            tile_rows = rows_k
        else:
            tile_rows = max(sub, _round_down(tile_rows, sub))

    grid = (pl.cdiv(rows_k, tile_rows),)  # ragged last tile is masked by Pallas

    out = pl.pallas_call(
        kernel,
        out_shape=jax.ShapeDtypeStruct((rows_k, dim_k), x.dtype),
        grid_spec=pltpu.PrefetchScalarGridSpec(
            num_scalar_prefetch=0,
            grid=grid,
            in_specs=[
                pl.BlockSpec((tile_rows, dim_k), lambda i: (i, 0)),
                pl.BlockSpec((1, dim_k), lambda i: (0, 0)),
            ] + extra_specs,
            out_specs=pl.BlockSpec((tile_rows, dim_k), lambda i: (i, 0)),
        ),
        compiler_params=pltpu.CompilerParams(
            dimension_semantics=("parallel",),
            vmem_limit_bytes=int(vmem_limit),
        ),
    )(x_k, g_k, *extra_inputs)
    return out.reshape(orig_shape)


def _ref_layernorm(x, gamma):
    x32 = x.astype(jnp.float32)
    mean = jnp.mean(x32, axis=-1, keepdims=True)
    var = jnp.mean((x32 - mean) ** 2, axis=-1, keepdims=True)
    out = (x32 - mean) / jnp.sqrt(var + EPS) * (gamma.astype(jnp.float32) + 1.0)
    return out.astype(x.dtype)


if __name__ == "__main__":
    key = jax.random.PRNGKey(0)
    k1, k2, k3, k4, kg, kg2 = jax.random.split(key, 6)

    # 1) Main check: lane-dense feature dim (128), module-init gamma = zeros.
    batch, seq, dim = 2, 8, 128
    x = jax.random.normal(k1, (batch, seq, dim), dtype=jnp.float32)
    gamma = jnp.zeros((dim,), dtype=jnp.float32)
    out = jax.block_until_ready(layernorm(x, gamma))
    assert jnp.allclose(out, _ref_layernorm(x, gamma), atol=1e-5, rtol=1e-5), "mismatch (main)"

    # 2) Ragged-grid check: rows not divisible by tile_rows, nonzero gamma
    #    (exercises cdiv grid + masked last tile, 200 rows / 64-row tiles).
    x_r = jax.random.normal(k2, (5, 40, dim), dtype=jnp.float32)
    gamma_r = 0.1 * jax.random.normal(kg, (dim,), dtype=jnp.float32)
    out_r = jax.block_until_ready(layernorm(x_r, gamma_r, tile_rows=64))
    assert jnp.allclose(out_r, _ref_layernorm(x_r, gamma_r), atol=1e-5, rtol=1e-5), "mismatch (ragged)"

    # 3) Small-dim lane-dense packed path (dim=32 as in the original module
    #    example; 4 logical rows per 128-lane row, segmented matmul reduction).
    x_s = jax.random.normal(k3, (2, 8, 32), dtype=jnp.float32)
    gamma_s = 0.1 * jax.random.normal(kg2, (32,), dtype=jnp.float32)
    out_s = jax.block_until_ready(layernorm(x_s, gamma_s))
    assert jnp.allclose(out_s, _ref_layernorm(x_s, gamma_s), atol=1e-5, rtol=1e-5), "mismatch (dim=32)"

    # 4) bf16 check (exercises dtype-aware sublane alignment of the row tile).
    x_b = jax.random.normal(k4, (4, 64, dim), dtype=jnp.bfloat16)
    gamma_b = jnp.zeros((dim,), dtype=jnp.float32)
    out_b = jax.block_until_ready(layernorm(x_b, gamma_b))
    assert jnp.allclose(out_b.astype(jnp.float32),
                        _ref_layernorm(x_b, gamma_b).astype(jnp.float32),
                        atol=2e-2, rtol=2e-2), "mismatch (bf16)"

    print("KERNEL_OK")
</pallas_src>

<mosaic_0001>
module attributes {stable_mosaic.version = 11 : i64} {
  func.func @_layernorm_kernel(%arg0: i32, %arg1: memref<8x128xf32, #tpu.memory_space<vmem>>, %arg2: memref<1x128xf32, #tpu.memory_space<vmem>>, %arg3: memref<8x128xf32, #tpu.memory_space<vmem>>) attributes {dimension_semantics = [#tpu.dimension_semantics<parallel>], iteration_bounds = array<i64: 2>, scalar_prefetch = 0 : i64, scratch_operands = 0 : i64, tpu.core_type = #tpu.core_type<tc>, window_params = [{transform_indices = @transform_0, window_bounds = array<i64: 8, 128>}, {pipeline_mode = #tpu.pipeline_mode<synchronous>, transform_indices = @transform_1, window_bounds = array<i64: 1, 128>}, {transform_indices = @transform_2, window_bounds = array<i64: 8, 128>}]} {
    %c0 = arith.constant 0 : index
    %c0_0 = arith.constant 0 : index
    %0 = vector.load %arg1[%c0, %c0_0] : memref<8x128xf32, #tpu.memory_space<vmem>>, vector<8x128xf32>
    %cst = arith.constant dense<0.000000e+00> : vector<8xf32>
    %1 = vector.multi_reduction <add>, %0, %cst [1] : vector<8x128xf32> to vector<8xf32>
    %2 = vector.shape_cast %1 : vector<8xf32> to vector<8x1xf32>
    %cst_1 = arith.constant 7.812500e-03 : f32
    %3 = vector.broadcast %cst_1 : f32 to vector<8x1xf32>
    %4 = arith.mulf %2, %3 : vector<8x1xf32>
    %5 = arith.mulf %0, %0 : vector<8x128xf32>
    %cst_2 = arith.constant dense<0.000000e+00> : vector<8xf32>
    %6 = vector.multi_reduction <add>, %5, %cst_2 [1] : vector<8x128xf32> to vector<8xf32>
    %7 = vector.shape_cast %6 : vector<8xf32> to vector<8x1xf32>
    %cst_3 = arith.constant 7.812500e-03 : f32
    %8 = vector.broadcast %cst_3 : f32 to vector<8x1xf32>
    %9 = arith.mulf %7, %8 : vector<8x1xf32>
    %10 = arith.mulf %4, %4 : vector<8x1xf32>
    %11 = arith.subf %9, %10 : vector<8x1xf32>
    %cst_4 = arith.constant 0.000000e+00 : f32
    %12 = vector.broadcast %cst_4 : f32 to vector<8x1xf32>
    %13 = arith.maximumf %11, %12 : vector<8x1xf32>
    %14 = vector.broadcast %4 : vector<8x1xf32> to vector<8x128xf32>
    %15 = arith.subf %0, %14 : vector<8x128xf32>
    %cst_5 = arith.constant 9.99999974E-6 : f32
    %16 = vector.broadcast %cst_5 : f32 to vector<8x1xf32>
    %17 = arith.addf %13, %16 : vector<8x1xf32>
    %18 = math.rsqrt %17 : vector<8x1xf32>
    %19 = vector.broadcast %18 : vector<8x1xf32> to vector<8x128xf32>
    %20 = arith.mulf %15, %19 : vector<8x128xf32>
    %c0_6 = arith.constant 0 : index
    %c0_7 = arith.constant 0 : index
    %21 = vector.load %arg2[%c0_6, %c0_7] : memref<1x128xf32, #tpu.memory_space<vmem>>, vector<1x128xf32>
    %22 = vector.broadcast %21 : vector<1x128xf32> to vector<8x128xf32>
    %23 = arith.mulf %20, %22 : vector<8x128xf32>
    %c0_8 = arith.constant 0 : index
    %c0_9 = arith.constant 0 : index
    %24 = vector.load %arg3[%c0_8, %c0_9] : memref<8x128xf32, #tpu.memory_space<vmem>>, vector<8x128xf32>
    tpu.vector_store %arg3[%c0_8, %c0_9], %23 {strides = array<i32>} : memref<8x128xf32, #tpu.memory_space<vmem>>, vector<8x128xf32>,
    return
  }
  func.func @transform_0(%arg0: i32) -> (i32, i32) {
    %c0_i32 = arith.constant 0 : i32
    %c0_i32_0 = arith.constant 0 : i32
    return %arg0, %c0_i32 : i32, i32
  }
  func.func @transform_1(%arg0: i32) -> (i32, i32) {
    %c0_i32 = arith.constant 0 : i32
    %c0_i32_0 = arith.constant 0 : i32
    %c0_i32_1 = arith.constant 0 : i32
    return %c0_i32, %c0_i32_0 : i32, i32
  }
  func.func @transform_2(%arg0: i32) -> (i32, i32) {
    %c0_i32 = arith.constant 0 : i32
    %c0_i32_0 = arith.constant 0 : i32
    return %arg0, %c0_i32 : i32, i32
  }
}

</mosaic_0001>

<llo_original>
// kernel: tpu_custom_call.1
$region0: #{tpu_custom_call.1}
  #allocation0 [shape = 'u32[]', space=smem, size = 0x4, offset = 0x4, fixed_abs, tag = 'smem constant byte address 0x4 - core index']
  #allocation1 [shape = 'u32[144,128]{1,0:T(1,128)}', space=vmem, size = 0x12000, scoped, tag = 'internal scratch']
  %s0 = inlined_call_operand.hbm [shape: f32[16,128], index: 0, kind: input, shape index: {}]
  %s1 = inlined_call_operand.vmem [shape: f32[1,128], index: 1, kind: input, shape index: {}]
  %s2 = inlined_call_operand.hbm [shape: f32[16,128], index: 2, kind: output, shape index: {}]
  %s3 = sld [smem:[#allocation0]]
  $region45: #{tpu_custom_call.1} parent=0
    _
  %s5 = ssub.s32 1, %s3
  %s6 = scalar_select 0, %s5, %s3
  $region1: #{tpu_custom_call.1} parent=0
    #allocation2 [shape = 'u8[8192]{0}', space=vmem, size = 0x2000, scoped, tag = 'input window, operand 0']
    #allocation3 [shape = 's32[2]{0}', space=sflag, size = 0x8, scoped, tag = 'scoped memory for tpu_custom_call.1']
    #allocation4 [shape = 's32[2]{0}', space=sflag, size = 0x8, scoped, tag = 'scoped memory for tpu_custom_call.1']
    #allocation5 [shape = 'u8[8192]{0}', space=vmem, size = 0x2000, scoped, tag = 'output window, operand 0']
    %7 = vsyncpa [#allocation3], 0
    %s8 = scalar_lea.sflag [#allocation3], 1
    %9 = vsyncpa %s8, 0
    %10 = vsyncpa [#allocation4], 0
    %s11 = scalar_lea.sflag [#allocation4], 1
    %12 = vsyncpa %s11, 0
    loop: start=0, step=1, limit=4
    $region2: #{tpu_custom_call.1} parent=1 // loop_pre_header
      _
    $region3: #{tpu_custom_call.1} parent=1 // loop_header
      %s14 = sphi 0, %s18
      %p15 = scmp.ge.s32.totalorder %s14, 4
      %s24 = sphi 0, %s26
      %s27 = sphi 0, %s24
      %s28 = sphi 0, %s27
      %s44 = sphi 0, %s28
      %s48 = sphi 0, %s48
      %s50 = sphi 0, %s48
      %s51 = sphi 0, %s50
      %s65 = sphi 0, %s51
      %s71 = sphi 0, %s73
      %s74 = sphi 0, %s71
      %s75 = sphi 0, %s74
      %s91 = sphi 0, %s75
    $region4: #{tpu_custom_call.1} parent=1 // loop_header_branch
      %17 = sbr.rel (%p15) target = $region8
    $region5: #{tpu_custom_call.1} parent=1 // loop_body
      %s19 = ssub.s32 %s14, 1
      %s20 = ssub.s32 %s14, 2
      %s21 = sadd.s32 %s14, 1
      %s22 = ssub.s32 %s14, %s21
      %p23 = scmp.eq.s32.totalorder %s22, 0
      %s25 = sadd.s32 %s24, 1
      %s26 = scalar_select %p23, %s24, %s25
      %p29 = pneg %p23
      %p30 = scmp.eq.s32.totalorder %s14, 1
      %p31 = por %p29, %p30
      %p32 = scmp.ne.s32.totalorder %s24, %s27
      %p33 = scmp.eq.s32.totalorder %s14, 0
      %p34 = por %p32, %p33
      %p35 = scmp.ne.s32.totalorder %s24, %s27
      %p36 = scmp.eq.s32.totalorder %s19, 1
      %p37 = por %p35, %p36
      %p38 = scmp.ne.s32.totalorder %s27, %s28
      %p39 = scmp.eq.s32.totalorder %s19, 0
      %p40 = por %p38, %p39
      %p41 = scmp.ne.s32.totalorder %s27, %s28
      %p42 = scmp.eq.s32.totalorder %s20, 1
      %p43 = por %p41, %p42
      %p45 = scmp.ne.s32.totalorder %s28, %s44
      %p46 = scmp.eq.s32.totalorder %s20, 0
      %p47 = por %p45, %p46
      %s49 = sadd.s32 %s48, 1
      %p52 = scmp.eq.s32.totalorder %s14, 1
      %p53 = scmp.ne.s32.totalorder %s48, %s50
      %p54 = scmp.eq.s32.totalorder %s14, 0
      %p55 = por %p53, %p54
      %p56 = scmp.ne.s32.totalorder %s48, %s50
      %p57 = scmp.eq.s32.totalorder %s19, 1
      %p58 = por %p56, %p57
      %p59 = scmp.ne.s32.totalorder %s50, %s51
      %p60 = scmp.eq.s32.totalorder %s19, 0
      %p61 = por %p59, %p60
      %p62 = scmp.ne.s32.totalorder %s50, %s51
      %p63 = scmp.eq.s32.totalorder %s20, 1
      %p64 = por %p62, %p63
      %p66 = scmp.ne.s32.totalorder %s51, %s65
      %p67 = scmp.eq.s32.totalorder %s20, 0
      %p68 = por %p66, %p67
      %s69 = ssub.s32 %s14, %s21
      %p70 = scmp.eq.s32.totalorder %s69, 0
      %s72 = sadd.s32 %s71, 1
      %s73 = scalar_select %p70, %s71, %s72
      %p76 = pneg %p70
      %p77 = scmp.eq.s32.totalorder %s14, 1
      %p78 = por %p76, %p77
      %p79 = scmp.ne.s32.totalorder %s71, %s74
      %p80 = scmp.eq.s32.totalorder %s14, 0
      %p81 = por %p79, %p80
      %p82 = scmp.ne.s32.totalorder %s71, %s74
      %p83 = scmp.eq.s32.totalorder %s19, 1
      %p84 = por %p82, %p83
      %p85 = scmp.ne.s32.totalorder %s74, %s75
      %p86 = scmp.eq.s32.totalorder %s19, 0
      %p87 = por %p85, %p86
      %p88 = scmp.ne.s32.totalorder %s74, %s75
      %p89 = scmp.eq.s32.totalorder %s20, 1
      %p90 = por %p88, %p89
      %p92 = scmp.ne.s32.totalorder %s75, %s91
      %p93 = scmp.eq.s32.totalorder %s20, 0
      %p94 = por %p92, %p93
      %p95 = scmp.le.s32.totalorder 1, %s14
      %p96 = scmp.lt.s32.totalorder %s14, 3
      %p97 = pnand %p95, %p96
      %p98 = pneg %p97
      // Predicated region
      $region9: #{tpu_custom_call.1} parent=5 // pred_check
        _
      $region10: #{tpu_custom_call.1} parent=5 // pred_check_branch
        %100 = sbr.rel (%p97) target = $region12
      $region11: #{tpu_custom_call.1} parent=5 // pred_region
        %s101 = ssub.s32 %s14, 1
        // Predicated region
        $region13: #{tpu_custom_call.1} parent=11 // pred_check
          %p102 = pneg %p61
        $region14: #{tpu_custom_call.1} parent=11 // pred_check_branch
          %104 = sbr.rel (%p102) target = $region16
        $region15: #{tpu_custom_call.1} parent=11 // pred_region
          _
        $region16: #{tpu_custom_call.1} parent=11 // pred_fallthru
          _
      $region12: #{tpu_custom_call.1} parent=5 // pred_fallthru
        _
      %p105 = scmp.lt.s32.totalorder %s14, 2
      // Predicated region
      $region17: #{tpu_custom_call.1} parent=5 // pred_check
        %p106 = pneg %p105
      $region18: #{tpu_custom_call.1} parent=5 // pred_check_branch
        %108 = sbr.rel (%p106) target = $region20
      $region19: #{tpu_custom_call.1} parent=5 // pred_region
        // Predicated region
        $region21: #{tpu_custom_call.1} parent=19 // pred_check
          %p109 = pneg %p34
        $region22: #{tpu_custom_call.1} parent=19 // pred_check_branch
          %111 = sbr.rel (%p109) target = $region24
        $region23: #{tpu_custom_call.1} parent=19 // pred_region
          %s112 = sand.u32 %s24, 1
          %s113 = scalar_lea.sflag [#allocation3], %s112
          %s114 = sand.u32 %s24, 1
          %s115 = smul.addr %s114, 8
          %s116 = scalar_lea.vmem [#allocation2], %s115
          %s118 = ssub.s32 128, 128
          %119 = vsyncadd %s113, %s118
          %s120 = smul.addr %s14, 128
          %s121 = scalar_lea.hbm %s0, %s120
          %s123 = sshll.u32 %s116, 4
          %s124 = int_to_ptr.vmem [resolvable:$true] %s123
          %126 = dma.hbm_to_vmem [thread:$0]  %s121, 128, %s124, %s113
        $region24: #{tpu_custom_call.1} parent=19 // pred_fallthru
          _
      $region20: #{tpu_custom_call.1} parent=5 // pred_fallthru
        _
      %p127 = scmp.le.s32.totalorder 1, %s14
      %p128 = scmp.lt.s32.totalorder %s14, 3
      %p129 = pnand %p127, %p128
      %p130 = pneg %p129
      // Predicated region
      $region25: #{tpu_custom_call.1} parent=5 // pred_check
        _
      $region26: #{tpu_custom_call.1} parent=5 // pred_check_branch
        %132 = sbr.rel (%p129) target = $region28
      $region27: #{tpu_custom_call.1} parent=5 // pred_region
        %s133 = ssub.s32 %s14, 1
        %s134 = sand.u32 %s27, 1
        %s135 = scalar_lea.sflag [#allocation3], %s134
        %s136 = sand.u32 %s27, 1
        %s137 = smul.addr %s136, 8
        %s138 = scalar_lea.vmem [#allocation2], %s137
        // Predicated region
        $region29: #{tpu_custom_call.1} parent=27 // pred_check
          %p139 = pneg %p40
        $region30: #{tpu_custom_call.1} parent=27 // pred_check_branch
          %141 = sbr.rel (%p139) target = $region32
        $region31: #{tpu_custom_call.1} parent=27 // pred_region
          %142 = dma.done %s135, 128
        $region32: #{tpu_custom_call.1} parent=27 // pred_fallthru
          _
        %s143 = sand.u32 %s27, 1
        %s144 = scalar_lea.sflag [#allocation3], %s143
        %s145 = sand.u32 %s27, 1
        %s146 = smul.addr %s145, 8
        %s147 = scalar_lea.vmem [#allocation2], %s146
        %p148 = pneg %p40
        %p149 = pneg %p37
        %p150 = pneg %p61
        %p151 = pneg %p58
        %p152 = pneg %p87
        %p153 = pneg %p84
        %s154 = sand.u32 %s74, 1
        %s155 = scalar_lea.sflag [#allocation4], %s154
        %s156 = sand.u32 %s74, 1
        %s157 = smul.addr %s156, 8
        %s158 = scalar_lea.vmem [#allocation5], %s157
        %v159 = vld [vmem:[%s138] sm:$0xff]
        %160 = vadd.xlane.f32.xlu0 %v159
        %v161 = vpop.xlane.xlu0 %160
        %v162 = vmul.f32 %v161, 0.0078125
        %v163 = vmul.f32 %v159, %v159
        %164 = vadd.xlane.f32.xlu0 %v163
        %v165 = vpop.xlane.xlu0 %164
        %v166 = vmul.f32 %v165, 0.0078125
        %v167 = vmul.f32 %v162, %v162
        %v168 = vsub.f32 %v166, %v167
        %v169 = vmax.f32 %v168, 0.0
        %v170 = vsub.f32 %v159, %v162
        %v171 = vadd.f32 %v169, 1e-05
        %v172 = vrsqrt.pop %v171
        %v173 = vmul.f32 %v170, %v172
        %v174 = vld [vmem:[%s1] sm:$0x1]
        %v176 = vlaneseq
        %v177 = vshrl.u32 %v176, 7
        %v178 = vsub.s32 0, %v177
        %v179 = vrot.slane %v174, %v178
        %v181 = vmul.f32 %v173, %v179
        %182 = vst [vmem:[%s158] sm:$0xff] %v181
        %s183 = sand.u32 %s74, 1
        %s184 = scalar_lea.sflag [#allocation4], %s183
        %s185 = sand.u32 %s74, 1
        %s186 = smul.addr %s185, 8
        %s187 = scalar_lea.vmem [#allocation5], %s186
        // Predicated region
        $region33: #{tpu_custom_call.1} parent=27 // pred_check
          %p188 = pneg %p84
        $region34: #{tpu_custom_call.1} parent=27 // pred_check_branch
          %190 = sbr.rel (%p188) target = $region36
        $region35: #{tpu_custom_call.1} parent=27 // pred_region
          %s192 = ssub.s32 128, 128
          %193 = vsyncadd %s184, %s192
          %s194 = smul.addr %s19, 128
          %s195 = scalar_lea.hbm %s2, %s194
          %s197 = sshll.u32 %s187, 4
          %s198 = int_to_ptr.vmem [resolvable:$true] %s197
          %200 = dma.vmem_to_hbm [thread:$0]  %s198, 128, %s195, %s184
        $region36: #{tpu_custom_call.1} parent=27 // pred_fallthru
          _
      $region28: #{tpu_custom_call.1} parent=5 // pred_fallthru
        _
      %p201 = scmp.le.s32.totalorder 2, %s14
      // Predicated region
      $region37: #{tpu_custom_call.1} parent=5 // pred_check
        %p202 = pneg %p201
      $region38: #{tpu_custom_call.1} parent=5 // pred_check_branch
        %204 = sbr.rel (%p202) target = $region40
      $region39: #{tpu_custom_call.1} parent=5 // pred_region
        %s205 = ssub.s32 %s14, 2
        // Predicated region
        $region41: #{tpu_custom_call.1} parent=39 // pred_check
          %p206 = pneg %p90
        $region42: #{tpu_custom_call.1} parent=39 // pred_check_branch
          %208 = sbr.rel (%p206) target = $region44
        $region43: #{tpu_custom_call.1} parent=39 // pred_region
          %s209 = sand.u32 %s75, 1
          %s210 = scalar_lea.sflag [#allocation4], %s209
          %s211 = sand.u32 %s75, 1
          %s212 = smul.addr %s211, 8
          %s213 = scalar_lea.vmem [#allocation5], %s212
          %214 = dma.done %s210, 128
        $region44: #{tpu_custom_call.1} parent=39 // pred_fallthru
          _
      $region40: #{tpu_custom_call.1} parent=5 // pred_fallthru
        _
    $region6: #{tpu_custom_call.1} parent=1 // loop_footer
      %s18 = sadd.s32 1, %s14
    $region7: #{tpu_custom_call.1} parent=1 // loop_footer_branch
      %13 = sbr.rel target = $region3
    $region8: #{tpu_custom_call.1} parent=1 // loop_exit
      _
    %215 = vsyncpa [#allocation3], 1
    %s216 = scalar_lea.sflag [#allocation3], 1
    %217 = vsyncpa %s216, 1
    %218 = vsyncpa [#allocation4], 1
    %s219 = scalar_lea.sflag [#allocation4], 1
    %220 = vsyncpa %s219, 1

</llo_original>
